<compile_context>
chip_gen: v6e
topology: v6e:2x2x1
jax: 0.10.0
libtpu: 0.0.40
codegen_flags: <defaults>
</compile_context>

<pallas_src>
import jax
import jax.numpy as jnp
from jax.experimental import pallas as pl
from jax.experimental.pallas import tpu as pltpu


# ----------------------------------------------------------------------------
# Interface classes mirroring the PyTorch module semantics exactly.
# ----------------------------------------------------------------------------
class LayerInterface:
    def __init__(self, *args, **kwargs) -> None:
        super().__init__()

    def forward(self, *args, **kwargs):
        error_msg = f"forward method not implemented in {self.__class__}"
        if len(args) > 0:
            error_msg += f"\n\targs: {args}"
        if len(kwargs) > 0:
            error_msg += f"\n\tkwargs: {kwargs}"
        raise NotImplementedError(error_msg)


class BaseDecoderInterface(LayerInterface):
    def __init__(self, *args, **kwargs) -> None:
        super().__init__(*args, **kwargs)

    def forward(self, *args, **kwargs):
        # Exactly matches the PyTorch forward: delegates to the base, which
        # raises NotImplementedError.
        super().forward(*args, **kwargs)


# ----------------------------------------------------------------------------
# Pallas copy kernel (used only when a materialized fresh buffer is requested).
# ----------------------------------------------------------------------------
_LANE_CANDIDATES = (4096, 2048, 1024, 512, 256, 128)
_TARGET_BLOCK_BYTES = 4 * 1024 * 1024      # ~4 MiB per block buffer
_VMEM_LIMIT_BYTES = 32 * 1024 * 1024       # 16 MiB pipelined buffers + headroom


def _copy_kernel(x_ref, o_ref):
    # Elementwise copy of the current (block_rows, lane) tile.
    o_ref[...] = x_ref[...]


def _sublane_pack(dtype) -> int:
    # Rows per packed (sublane, 128) tile: f32 -> 8, bf16 -> 16, int8/fp8 -> 32.
    itemsize = jnp.dtype(dtype).itemsize
    return max(8, 32 // max(1, itemsize))


def _choose_lane(total: int):
    # Largest lane-dense width (multiple of 128) that evenly divides `total`.
    for lane in _LANE_CANDIDATES:
        if total >= lane and total % lane == 0:
            return lane
    return None


def _grid_semantics(grid_size: int):
    # v7x is the only listed generation with 2 TensorCores per chip; shard the
    # copy grid across both cores there.  Everywhere else "parallel" is safe.
    core_parallel = getattr(pltpu, "CORE_PARALLEL", None)
    if core_parallel is not None and grid_size >= 2:
        try:
            kind = jax.devices()[0].device_kind.lower()
        except Exception:
            kind = ""
        if "v7" in kind:
            return (core_parallel,)
    return ("parallel",)


def _block_rows_for(rows: int, lane: int, dtype) -> int:
    itemsize = jnp.dtype(dtype).itemsize
    pack = _sublane_pack(dtype)
    max_rows = max(pack, (_TARGET_BLOCK_BYTES // (lane * itemsize)) // pack * pack)
    # If the whole array fits in one block, use the full extent (full-dims
    # exemption to the (8,128) rule); otherwise a whole-packed-tile multiple.
    return rows if rows <= max_rows else max_rows


def _pallas_copy_2d(x2d: jax.Array, block_rows: int) -> jax.Array:
    rows, lane = x2d.shape
    itemsize = x2d.dtype.itemsize
    grid = (pl.cdiv(rows, block_rows),)
    return pl.pallas_call(
        _copy_kernel,
        out_shape=jax.ShapeDtypeStruct((rows, lane), x2d.dtype),
        grid=grid,
        in_specs=[pl.BlockSpec((block_rows, lane), lambda i: (i, 0))],
        out_specs=pl.BlockSpec((block_rows, lane), lambda i: (i, 0)),
        compiler_params=pltpu.CompilerParams(
            dimension_semantics=_grid_semantics(grid[0]),
            vmem_limit_bytes=_VMEM_LIMIT_BYTES,
        ),
        cost_estimate=pl.CostEstimate(
            flops=0,
            transcendentals=0,
            bytes_accessed=2 * rows * lane * itemsize,
        ),
    )(x2d)


def _pallas_materialized_copy(x: jax.Array) -> jax.Array:
    """Produce a fresh (non-aliased) HBM buffer equal to x via Pallas."""
    total = int(x.size)
    if total == 0:
        return x

    x_flat = x.reshape(total)
    lane = _choose_lane(total)

    if lane is not None:
        # Lane-dense path: full-width unmasked stores, tiled/pipelined.
        rows = total // lane
        y_flat = _pallas_copy_2d(
            x_flat.reshape(rows, lane), _block_rows_for(rows, lane, x.dtype)
        ).reshape(total)
        return y_flat.reshape(x.shape)

    # Ragged total (not a multiple of 128): copy the 128-aligned bulk through
    # lane-dense tiles and handle only the tiny tail as a single small block.
    bulk = (total // 128) * 128
    parts = []
    if bulk > 0:
        lane_b = _choose_lane(bulk)
        rows_b = bulk // lane_b
        parts.append(
            _pallas_copy_2d(
                x_flat[:bulk].reshape(rows_b, lane_b),
                _block_rows_for(rows_b, lane_b, x.dtype),
            ).reshape(bulk)
        )
    tail = total - bulk
    if tail > 0:
        # TODO(synk): the tail block uses lane-masked stores; negligible since
        # tail < 128 elements by construction.
        parts.append(_pallas_copy_2d(x_flat[bulk:].reshape(1, tail), 1).reshape(tail))
    y_flat = parts[0] if len(parts) == 1 else jnp.concatenate(parts, axis=0)
    return y_flat.reshape(x.shape)


def decoder_identity(x: jax.Array, *, materialize: bool = False) -> jax.Array:
    """Identity decoder forward.

    Default (materialize=False): zero-cost pass-through — the abstract
    interface defines no parameters and no compute, so no HBM bytes are moved
    at all (the dominant optimization on every TPU generation).

    materialize=True: return a fresh, non-aliased HBM buffer produced by the
    Pallas copy kernel (for callers that require an independent output).
    """
    if not materialize:
        return x
    return _pallas_materialized_copy(x)


class PallasIdentityDecoder(BaseDecoderInterface):
    # TODO(synk): the abstract interface defines no parameters or compute; the
    # identity pass-through is the only faithful concrete realization.
    def forward(self, x, *args, materialize: bool = False, **kwargs):
        return decoder_identity(x, materialize=materialize)


if __name__ == "__main__":
    # Deterministic small example consistent with a decoder:
    # batch=2, seq=8, hidden=32.
    key = jax.random.PRNGKey(0)
    shape = (2, 8, 32)
    x = jax.random.normal(key, shape, dtype=jnp.float32)

    # 1) Verify the abstract interface reproduces the PyTorch semantics
    #    (forward raises NotImplementedError).
    iface = BaseDecoderInterface()
    try:
        iface.forward(x)
        raise RuntimeError("expected NotImplementedError from interface.forward")
    except NotImplementedError:
        pass

    dec = PallasIdentityDecoder()

    # 2) Default zero-cost pass-through: returns the same array, zero HBM traffic.
    y_fast = dec.forward(x)
    assert y_fast is x, "pass-through path should not move or copy data"

    # 3) Materialized Pallas copy kernel: run once, block, verify.
    y = jax.block_until_ready(dec.forward(x, materialize=True))
    assert y.shape == shape and y.dtype == jnp.float32
    assert bool(jnp.array_equal(y, x)), "identity kernel mismatch"

    # 4) Ragged-total path (total % 128 != 0): bulk tiles + tiny tail block.
    x_ragged = jax.random.normal(jax.random.PRNGKey(1), (2, 9, 50), jnp.float32)
    y_ragged = jax.block_until_ready(dec.forward(x_ragged, materialize=True))
    assert y_ragged.shape == x_ragged.shape
    assert bool(jnp.array_equal(y_ragged, x_ragged)), "ragged identity mismatch"

    print("KERNEL_OK")
</pallas_src>

<mosaic_0001>
module attributes {stable_mosaic.version = 11 : i64} {
  func.func @_copy_kernel(%arg0: i32, %arg1: memref<1x512xf32, #tpu.memory_space<vmem>>, %arg2: memref<1x512xf32, #tpu.memory_space<vmem>>) attributes {dimension_semantics = [#tpu.dimension_semantics<parallel>], iteration_bounds = array<i64: 1>, scalar_prefetch = 0 : i64, scratch_operands = 0 : i64, tpu.core_type = #tpu.core_type<tc>, window_params = [{transform_indices = @transform_0, window_bounds = array<i64: 1, 512>}, {transform_indices = @transform_1, window_bounds = array<i64: 1, 512>}]} {
    %c0 = arith.constant 0 : index
    %c0_0 = arith.constant 0 : index
    %0 = vector.load %arg1[%c0, %c0_0] : memref<1x512xf32, #tpu.memory_space<vmem>>, vector<1x512xf32>
    %c0_1 = arith.constant 0 : index
    %c0_2 = arith.constant 0 : index
    %1 = vector.load %arg2[%c0_1, %c0_2] : memref<1x512xf32, #tpu.memory_space<vmem>>, vector<1x512xf32>
    tpu.vector_store %arg2[%c0_1, %c0_2], %0 {strides = array<i32>} : memref<1x512xf32, #tpu.memory_space<vmem>>, vector<1x512xf32>,
    return
  }
  func.func @transform_0(%arg0: i32) -> (i32, i32) {
    %c0_i32 = arith.constant 0 : i32
    %c0_i32_0 = arith.constant 0 : i32
    return %arg0, %c0_i32 : i32, i32
  }
  func.func @transform_1(%arg0: i32) -> (i32, i32) {
    %c0_i32 = arith.constant 0 : i32
    %c0_i32_0 = arith.constant 0 : i32
    return %arg0, %c0_i32 : i32, i32
  }
}

</mosaic_0001>

<llo_original>
// kernel: tpu_custom_call.1
$region0: #{tpu_custom_call.1}
  #allocation0 [shape = 'u32[]', space=smem, size = 0x4, offset = 0x4, fixed_abs, tag = 'smem constant byte address 0x4 - core index']
  #allocation1 [shape = 'u32[144,128]{1,0:T(1,128)}', space=vmem, size = 0x12000, scoped, tag = 'internal scratch']
  %s0 = inlined_call_operand.hbm [shape: f32[1,512], index: 0, kind: input, shape index: {}]
  %s1 = inlined_call_operand.hbm [shape: f32[1,512], index: 1, kind: output, shape index: {}]
  %s2 = sld [smem:[#allocation0]]
  $region18: #{tpu_custom_call.1} parent=0
    _
  %s4 = ssub.s32 1, %s2
  %s5 = scalar_select 0, %s4, %s2
  $region1: #{tpu_custom_call.1} parent=0
    #allocation2 [shape = 'u8[2048]{0}', space=vmem, size = 0x800, scoped, tag = 'input window, operand 0, single buffered']
    #allocation3 [shape = 's32[1]{0}', space=sflag, size = 0x4, scoped, tag = 'scoped memory for tpu_custom_call.1']
    #allocation4 [shape = 's32[1]{0}', space=sflag, size = 0x4, scoped, tag = 'scoped memory for tpu_custom_call.1']
    #allocation5 [shape = 'u8[2048]{0}', space=vmem, size = 0x800, scoped, tag = 'output window, operand 0, single buffered']
    %6 = vsyncpa [#allocation3], 0
    %7 = vsyncpa [#allocation4], 0
    // Predicated region
    $region2: #{tpu_custom_call.1} parent=1 // pred_check
      _
    $region3: #{tpu_custom_call.1} parent=1 // pred_check_branch
      %9 = sbr.rel (0) target = $region5
    $region4: #{tpu_custom_call.1} parent=1 // pred_region
      %s11 = ssub.s32 64, 64
      %12 = vsyncadd [#allocation3], %s11
      %s14 = sshll.u32 [#allocation2], 4
      %s15 = int_to_ptr.vmem [resolvable:$true] %s14
      %17 = dma.hbm_to_vmem [thread:$0]  %s0, 64, %s15, [#allocation3]
    $region5: #{tpu_custom_call.1} parent=1 // pred_fallthru
      _
    // Predicated region
    $region6: #{tpu_custom_call.1} parent=1 // pred_check
      _
    $region7: #{tpu_custom_call.1} parent=1 // pred_check_branch
      %19 = sbr.rel (0) target = $region9
    $region8: #{tpu_custom_call.1} parent=1 // pred_region
      %20 = dma.done [#allocation3], 64
    $region9: #{tpu_custom_call.1} parent=1 // pred_fallthru
      _
    %v21 = vld [vmem:[#allocation2] sm:$0xf]
    %v22 = vlaneseq
    %vm23 = vcmp.ge.s32.totalorder %v22, 0
    %vm24 = vcmp.lt.s32.totalorder %v22, 512
    %vm25 = vmand %vm23, %vm24
    %26 = vst.msk [vmem:[#allocation5] sm:$0xf] %vm25, %v21
    // Predicated region
    $region10: #{tpu_custom_call.1} parent=1 // pred_check
      _
    $region11: #{tpu_custom_call.1} parent=1 // pred_check_branch
      %28 = sbr.rel (0) target = $region13
    $region12: #{tpu_custom_call.1} parent=1 // pred_region
      %s30 = ssub.s32 64, 64
      %31 = vsyncadd [#allocation4], %s30
      %s33 = sshll.u32 [#allocation5], 4
      %s34 = int_to_ptr.vmem [resolvable:$true] %s33
      %36 = dma.vmem_to_hbm [thread:$0]  %s34, 64, %s1, [#allocation4]
    $region13: #{tpu_custom_call.1} parent=1 // pred_fallthru
      _
    // Predicated region
    $region14: #{tpu_custom_call.1} parent=1 // pred_check
      _
    $region15: #{tpu_custom_call.1} parent=1 // pred_check_branch
      %38 = sbr.rel (0) target = $region17
    $region16: #{tpu_custom_call.1} parent=1 // pred_region
      %39 = dma.done [#allocation4], 64
    $region17: #{tpu_custom_call.1} parent=1 // pred_fallthru
      _
    %40 = vsyncpa [#allocation3], 1
    %41 = vsyncpa [#allocation4], 1

</llo_original>
